<compile_context>
chip_gen: v6e
topology: v6e:2x2x1
jax: 0.10.0
libtpu: 0.0.40
codegen_flags: <defaults>
</compile_context>

<pallas_src>
import jax
import jax.numpy as jnp
from jax import lax
from jax.experimental import pallas as pl
from jax.experimental.pallas import tpu as pltpu


_VMEM_LIMIT = 32 * 1024 * 1024        # > v5e's 16 MiB scoped default, <= every chip's physical cap
_TILE_VMEM_BUDGET = 24 * 1024 * 1024  # budget for the resident batch_H+proj slab per tile


def _pick_batch_tile(B, row_bytes=0, num_tc=1, vmem_budget=_TILE_VMEM_BUDGET):
    """Batch tile size.  Blocks that carry the batch axis in their last-two dims
    require BT to be a multiple of 8 or equal to B.  Prefers the largest tile
    whose (double-buffered) batch_H+proj slab fits `vmem_budget`, with the tile
    count a multiple of `num_tc` (set num_tc=2 on v7x so both TensorCores get
    equal work; leave 1 on single-TC v5e/v6e -> one big tile, fewer grid steps)."""
    if B % 8 != 0:
        return B  # ragged batch -> single tile; pad B to a multiple of 8 upstream for big batches
    cands = [bt for bt in range(8, B + 1, 8)
             if B % bt == 0 and (row_bytes * bt <= vmem_budget or bt == 8)]
    even = [bt for bt in cands if (B // bt) % num_tc == 0]
    return max(even or cands)


# ---------------- one-shot kernel: step-invariant i2h projection ----------------

def _i2h_proj_kernel(batch_H_ref, wi2h_ref, bh2h_ref, proj_ref):
    w = wi2h_ref[...]                                              # [I, H]
    x = batch_H_ref[...].astype(w.dtype)                           # [BT, T, I]
    # Contract the last axis of the 3-D block directly (no BT*T reshape -> no
    # (8,128) relayout copies when T is not a multiple of 8).
    proj = lax.dot_general(x, w, dimension_numbers=(((2,), (0,)), ((), ())),
                           preferred_element_type=jnp.float32)     # [BT, T, H]
    # Fold the h2h bias in once per sequence (removes one DMA + add per step).
    proj_ref[...] = (proj + bh2h_ref[...][None, :, :]).astype(proj_ref.dtype)


def precompute_batch_H_proj(batch_H, prep, num_tc=1):
    """i2h(batch_H) + b_h2h: identical every decode step -> computed once per sequence."""
    B, T, I = batch_H.shape
    H = prep["w_i2h_t"].shape[1]
    store = prep["store_dtype"]
    sb = jnp.dtype(store).itemsize
    row_bytes = 2 * T * (I * batch_H.dtype.itemsize + H * sb)
    BT = _pick_batch_tile(B, row_bytes, num_tc)
    ce = pl.CostEstimate(
        flops=int(2 * B * T * I * H),
        transcendentals=0,
        bytes_accessed=int(B * T * I * batch_H.dtype.itemsize + I * H * sb + B * T * H * sb),
    )
    return pl.pallas_call(
        _i2h_proj_kernel,
        out_shape=jax.ShapeDtypeStruct((B, T, H), store),
        grid=(B // BT,),
        in_specs=[
            pl.BlockSpec((BT, T, I), lambda b: (b, 0, 0)),
            pl.BlockSpec((I, H), lambda b: (0, 0)),
            pl.BlockSpec((1, H), lambda b: (0, 0)),
        ],
        out_specs=pl.BlockSpec((BT, T, H), lambda b: (b, 0, 0)),
        compiler_params=pltpu.CompilerParams(
            dimension_semantics=("parallel",),
            vmem_limit_bytes=_VMEM_LIMIT,
        ),
        cost_estimate=ce,
    )(batch_H, prep["w_i2h_t"], prep["b_h2h"])


# -------------------- fused multi-step attention decode kernel --------------------

def _attention_decode_kernel(
    batch_H_ref, proj_ref, h0_ref, c0_ref, onehots_ref,
    wh2h_ref, wscore_ref, wih_ctx_ref, wih_emb_ref, whh_ref, b_gate_ref,
    hid_out_ref, alpha_out_ref, h_fin_ref, c_fin_ref,
    h_scr, c_scr,
):
    step = pl.program_id(1)
    H = wh2h_ref.shape[0]

    # h/c carried across the step axis in VMEM scratch; init at step 0.
    @pl.when(step == 0)
    def _():
        h_scr[...] = h0_ref[...]
        c_scr[...] = c0_ref[...]

    h = h_scr[...]                                                 # [BT, H] f32
    c = c_scr[...]                                                 # [BT, H] f32

    # h2h(prev_hidden[0]); its bias is already folded into proj.
    hproj = jnp.dot(h.astype(wh2h_ref.dtype), wh2h_ref[...],
                    preferred_element_type=jnp.float32)            # [BT, H]

    # e = score(tanh(i2h(batch_H) + h2h(h) + b)), contracted over H.
    # TODO(synk): route this contraction onto the MXU (dot_general over H) iff
    # the bundle dump shows VALU/XLU as the binding slot now that the kernel is
    # no longer HBM-bound.
    tanh_sum = jnp.tanh(proj_ref[...].astype(jnp.float32) + hproj[:, None, :])   # [BT, T, H]
    e = jnp.sum(tanh_sum * wscore_ref[...][None, :, :], axis=-1)   # [BT, T]

    # softmax over the encoder-step (T) axis
    m = jnp.max(e, axis=1, keepdims=True)
    p = jnp.exp(e - m)
    alpha = p / jnp.sum(p, axis=1, keepdims=True)                  # [BT, T]
    alpha_out_ref[...] = alpha[None, :, :]                         # lane-dense store

    # context = bmm(alpha^T, batch_H).squeeze(1)
    batch_H = batch_H_ref[...].astype(jnp.float32)                 # [BT, T, I]
    context = jnp.sum(alpha[:, :, None] * batch_H, axis=1)         # [BT, I]

    # LSTMCell on concat([context, char_onehot]); the one-hot half of w_ih is a
    # tiny K=E dot done in-kernel (no wrapper dispatch / HBM round-trip), and
    # (b_ih + b_hh) is a single pre-summed bias.
    gates = (
        jnp.dot(context.astype(wih_ctx_ref.dtype), wih_ctx_ref[...],
                preferred_element_type=jnp.float32)
        + jnp.dot(h.astype(whh_ref.dtype), whh_ref[...],
                  preferred_element_type=jnp.float32)
        + jnp.dot(onehots_ref[0].astype(wih_emb_ref.dtype), wih_emb_ref[...],
                  preferred_element_type=jnp.float32)
        + b_gate_ref[...]
    )                                                              # [BT, 4H]

    i_g = jax.nn.sigmoid(gates[:, 0:H])
    f_g = jax.nn.sigmoid(gates[:, H:2 * H])
    g_g = jnp.tanh(gates[:, 2 * H:3 * H])
    o_g = jax.nn.sigmoid(gates[:, 3 * H:4 * H])

    c_new = f_g * c + i_g * g_g
    h_new = o_g * jnp.tanh(c_new)

    h_scr[...] = h_new
    c_scr[...] = c_new
    hid_out_ref[...] = h_new[None, :, :]
    h_fin_ref[...] = h_new     # resident across the step axis; last write wins
    c_fin_ref[...] = c_new


# -------------------------------- python wrappers --------------------------------

def prepare_attention_params(params, input_size, matmul_dtype=jnp.float32):
    """Once-per-model weight prep: transposes, w_ih split, pre-summed biases.
    matmul_dtype=bf16 stores batch_H/proj and MXU operands in bf16 (f32
    accumulation kept); keep f32 to match the PyTorch reference bit-tightly."""
    H = params["w_h2h"].shape[0]
    I = input_size
    return {
        "store_dtype": matmul_dtype,
        "w_i2h_t":    jnp.asarray(params["w_i2h"]).T.astype(matmul_dtype),        # [I, H]
        "w_h2h_t":    jnp.asarray(params["w_h2h"]).T.astype(matmul_dtype),        # [H, H]
        "b_h2h":      jnp.asarray(params["b_h2h"]).reshape(1, H).astype(jnp.float32),
        "w_score":    jnp.asarray(params["w_score"]).astype(jnp.float32),         # [1, H]
        "w_ih_ctx_t": jnp.asarray(params["w_ih"])[:, :I].T.astype(matmul_dtype),  # [I, 4H]
        "w_ih_emb_t": jnp.asarray(params["w_ih"])[:, I:].T.astype(jnp.float32),   # [E, 4H]
        "w_hh_t":     jnp.asarray(params["w_hh"]).T.astype(matmul_dtype),         # [H, 4H]
        "b_gate":     (jnp.asarray(params["b_ih"]) + jnp.asarray(params["b_hh"]))
                      .reshape(1, 4 * H).astype(jnp.float32),
    }


def prepare_sequence(batch_H, prep, num_tc=1):
    """Once-per-sequence work (hoist out of any decode loop): cast batch_H to the
    kernel storage dtype and compute the step-invariant i2h projection."""
    return batch_H.astype(prep["store_dtype"]), precompute_batch_H_proj(batch_H, prep, num_tc)


def attention_decode_fused(prev_hidden, batch_H, onehots_seq, prep, proj=None, num_tc=1):
    """Run num_steps teacher-forced decode steps in ONE pallas_call.

    batch_H / proj are DMA'd once per batch tile and stay VMEM-resident across
    the whole fused step loop; h/c are carried in VMEM scratch.

    onehots_seq: [num_steps, B, num_embeddings] (per-step char one-hots).
    Returns ((h_T, c_T), hiddens [num_steps, B, H], alphas [num_steps, B, T]).
    """
    h0, c0 = prev_hidden
    B, T, I = batch_H.shape
    H = h0.shape[1]
    S, _, E = onehots_seq.shape
    store = prep["store_dtype"]

    if proj is None:
        batch_H, proj = prepare_sequence(batch_H, prep, num_tc)
    else:
        batch_H = batch_H.astype(store)

    sb = jnp.dtype(store).itemsize
    BT = _pick_batch_tile(B, row_bytes=2 * T * (I + H) * sb, num_tc=num_tc)
    grid = (B // BT, S)

    mm_flops = 2 * (H * H + T * H + T * I + I * 4 * H + H * 4 * H + E * 4 * H)
    ce = pl.CostEstimate(
        flops=int(S * B * mm_flops),
        transcendentals=int(S * B * (T * H + T + 5 * H)),
        bytes_accessed=int(B * T * (I + H) * sb                     # batch_H + proj (once/tile)
                           + (H * H + I * 4 * H + H * 4 * H + E * 4 * H) * sb
                           + S * B * (E + 2 * H + T + H) * 4),      # per-step ins/outs
    )

    hiddens, alphas, h_fin, c_fin = pl.pallas_call(
        _attention_decode_kernel,
        out_shape=(
            jax.ShapeDtypeStruct((S, B, H), jnp.float32),   # hidden per step
            jax.ShapeDtypeStruct((S, B, T), jnp.float32),   # alpha per step (lane-dense)
            jax.ShapeDtypeStruct((B, H), jnp.float32),      # final h
            jax.ShapeDtypeStruct((B, H), jnp.float32),      # final c
        ),
        grid=grid,
        in_specs=[
            pl.BlockSpec((BT, T, I), lambda b, s: (b, 0, 0)),   # batch_H (step-resident)
            pl.BlockSpec((BT, T, H), lambda b, s: (b, 0, 0)),   # i2h proj (step-resident)
            pl.BlockSpec((BT, H), lambda b, s: (b, 0)),         # h0
            pl.BlockSpec((BT, H), lambda b, s: (b, 0)),         # c0
            pl.BlockSpec((1, BT, E), lambda b, s: (s, b, 0)),   # per-step one-hots
            pl.BlockSpec((H, H), lambda b, s: (0, 0)),          # w_h2h^T
            pl.BlockSpec((1, H), lambda b, s: (0, 0)),          # w_score
            pl.BlockSpec((I, 4 * H), lambda b, s: (0, 0)),      # w_ih (context half)^T
            pl.BlockSpec((E, 4 * H), lambda b, s: (0, 0)),      # w_ih (one-hot half)^T
            pl.BlockSpec((H, 4 * H), lambda b, s: (0, 0)),      # w_hh^T
            pl.BlockSpec((1, 4 * H), lambda b, s: (0, 0)),      # b_ih + b_hh
        ],
        out_specs=(
            pl.BlockSpec((1, BT, H), lambda b, s: (s, b, 0)),
            pl.BlockSpec((1, BT, T), lambda b, s: (s, b, 0)),
            pl.BlockSpec((BT, H), lambda b, s: (b, 0)),
            pl.BlockSpec((BT, H), lambda b, s: (b, 0)),
        ),
        scratch_shapes=[
            pltpu.VMEM((BT, H), jnp.float32),   # h carry
            pltpu.VMEM((BT, H), jnp.float32),   # c carry
        ],
        compiler_params=pltpu.CompilerParams(
            dimension_semantics=("parallel", "arbitrary"),
            vmem_limit_bytes=_VMEM_LIMIT,
        ),
        cost_estimate=ce,
    )(batch_H, proj, h0, c0, onehots_seq,
      prep["w_h2h_t"], prep["w_score"], prep["w_ih_ctx_t"],
      prep["w_ih_emb_t"], prep["w_hh_t"], prep["b_gate"])

    return (h_fin, c_fin), hiddens, alphas


def attention_cell_step(prev_hidden, batch_H, char_onehots, prep, proj=None, num_tc=1):
    """One decode step (num_steps==1 instance of the fused kernel).  Use only for
    data-dependent greedy decode; hoist prepare_attention_params() and
    prepare_sequence() out of the loop.  For teacher forcing, use
    attention_decode_fused() to keep batch_H/proj resident across all steps."""
    (h1, c1), _, alphas = attention_decode_fused(
        prev_hidden, batch_H, char_onehots[None], prep, proj=proj, num_tc=num_tc)
    return (h1, c1), alphas[0][:, :, None]   # alpha as [B, T, 1] (module interface)


def attention_cell(prev_hidden, batch_H, char_onehots, params, matmul_dtype=jnp.float32):
    """Convenience wrapper matching AttentionCell.forward (single step)."""
    prep = prepare_attention_params(params, batch_H.shape[-1], matmul_dtype)
    batch_H_s, proj = prepare_sequence(batch_H, prep)
    return attention_cell_step(prev_hidden, batch_H_s, char_onehots, prep, proj=proj)


def attention_cell_reference(prev_hidden, batch_H, char_onehots, params):
    """Pure-JAX reference mirroring the PyTorch forward exactly."""
    h0, c0 = prev_hidden
    H = h0.shape[1]
    proj = batch_H @ params["w_i2h"].T
    hproj = h0 @ params["w_h2h"].T + params["b_h2h"]
    e = jnp.tanh(proj + hproj[:, None, :]) @ params["w_score"].T        # [B, T, 1]
    alpha = jax.nn.softmax(e, axis=1)
    context = jnp.einsum("bto,bti->bi", alpha, batch_H)
    concat = jnp.concatenate([context, char_onehots], axis=1)
    gates = concat @ params["w_ih"].T + params["b_ih"] + h0 @ params["w_hh"].T + params["b_hh"]
    i = jax.nn.sigmoid(gates[:, :H])
    f = jax.nn.sigmoid(gates[:, H:2 * H])
    g = jnp.tanh(gates[:, 2 * H:3 * H])
    o = jax.nn.sigmoid(gates[:, 3 * H:4 * H])
    c1 = f * c0 + i * g
    h1 = o * jnp.tanh(c1)
    return (h1, c1), alpha


if __name__ == "__main__":
    # Small shapes consistent with the module:
    B, T = 2, 8          # batch, num encoder steps
    I = 32               # input_size (encoder feature dim)
    H = 32               # hidden_size
    E = 10               # num_embeddings (one-hot vocab size)
    S = 4                # decode steps for the fused variant

    key = jax.random.PRNGKey(0)
    keys = jax.random.split(key, 14)

    params = {
        "w_i2h":   0.1 * jax.random.normal(keys[0], (H, I), jnp.float32),
        "w_h2h":   0.1 * jax.random.normal(keys[1], (H, H), jnp.float32),
        "b_h2h":   0.1 * jax.random.normal(keys[2], (H,), jnp.float32),
        "w_score": 0.1 * jax.random.normal(keys[3], (1, H), jnp.float32),
        "w_ih":    0.1 * jax.random.normal(keys[4], (4 * H, I + E), jnp.float32),
        "w_hh":    0.1 * jax.random.normal(keys[5], (4 * H, H), jnp.float32),
        "b_ih":    0.1 * jax.random.normal(keys[6], (4 * H,), jnp.float32),
        "b_hh":    0.1 * jax.random.normal(keys[7], (4 * H,), jnp.float32),
    }

    batch_H = jax.random.normal(keys[8], (B, T, I), jnp.float32)
    h0 = jax.random.normal(keys[9], (B, H), jnp.float32)
    c0 = jax.random.normal(keys[10], (B, H), jnp.float32)
    char_ids = jax.random.randint(keys[11], (B,), 0, E)
    char_onehots = jax.nn.one_hot(char_ids, E, dtype=jnp.float32)

    # --- 1. single step, module-equivalent call (f32 exact path) ---
    (h1, c1), alpha = attention_cell((h0, c0), batch_H, char_onehots, params)
    jax.block_until_ready((h1, c1, alpha))
    (h1_r, c1_r), alpha_r = attention_cell_reference((h0, c0), batch_H, char_onehots, params)
    assert jnp.allclose(h1, h1_r, atol=1e-5), "h mismatch"
    assert jnp.allclose(c1, c1_r, atol=1e-5), "c mismatch"
    assert jnp.allclose(alpha, alpha_r, atol=1e-5), "alpha mismatch"

    # --- 2. fused multi-step decode (teacher forcing), f32 exact path ---
    step_ids = jax.random.randint(keys[12], (S, B), 0, E)
    onehots_seq = jax.nn.one_hot(step_ids, E, dtype=jnp.float32)
    prep = prepare_attention_params(params, I)
    bHs, proj = prepare_sequence(batch_H, prep)
    (hS, cS), hiddens, alphas = attention_decode_fused((h0, c0), bHs, onehots_seq, prep, proj=proj)
    jax.block_until_ready((hS, cS, hiddens, alphas))
    h_r, c_r = h0, c0
    for s in range(S):
        (h_r, c_r), a_r = attention_cell_reference((h_r, c_r), batch_H, onehots_seq[s], params)
        assert jnp.allclose(hiddens[s], h_r, atol=1e-5), f"fused h mismatch @ step {s}"
        assert jnp.allclose(alphas[s], a_r[..., 0], atol=1e-5), f"fused alpha mismatch @ step {s}"
    assert jnp.allclose(hS, h_r, atol=1e-5), "fused final h mismatch"
    assert jnp.allclose(cS, c_r, atol=1e-5), "fused final c mismatch"

    # --- 3. bf16-stored batch_H/proj + bf16 MXU operands (perf path; looser tol) ---
    prep_bf = prepare_attention_params(params, I, matmul_dtype=jnp.bfloat16)
    bHb, projb = prepare_sequence(batch_H, prep_bf)
    (hSb, cSb), hiddens_b, _ = attention_decode_fused((h0, c0), bHb, onehots_seq, prep_bf, proj=projb)
    jax.block_until_ready((hSb, cSb))
    assert jnp.allclose(hSb, h_r, atol=5e-2), "bf16 final h mismatch"
    assert jnp.allclose(cSb, c_r, atol=5e-2), "bf16 final c mismatch"
    assert jnp.allclose(hiddens_b, hiddens, atol=5e-2), "bf16 hiddens mismatch"

    # --- 4. per-step external decode loop (data-dependent case) with hoisted prep/proj ---
    h_k, c_k = h0, c0
    h_r2, c_r2 = h0, c0
    for sk in jax.random.split(keys[13], 3):
        ids = jax.random.randint(sk, (B,), 0, E)
        oneh = jax.nn.one_hot(ids, E, dtype=jnp.float32)
        (h_k, c_k), a_k = attention_cell_step((h_k, c_k), bHs, oneh, prep, proj=proj)
        (h_r2, c_r2), a_r2 = attention_cell_reference((h_r2, c_r2), batch_H, oneh, params)
        assert jnp.allclose(h_k, h_r2, atol=1e-4), "loop h mismatch"
        assert jnp.allclose(c_k, c_r2, atol=1e-4), "loop c mismatch"
        assert jnp.allclose(a_k, a_r2, atol=1e-4), "loop alpha mismatch"
    jax.block_until_ready((h_k, c_k))

    print("KERNEL_OK")
</pallas_src>

<mosaic_0001>
module attributes {stable_mosaic.version = 11 : i64} {
  func.func @_i2h_proj_kernel(%arg0: i32, %arg1: memref<2x8x32xf32, #tpu.memory_space<vmem>>, %arg2: memref<32x32xf32, #tpu.memory_space<vmem>>, %arg3: memref<1x32xf32, #tpu.memory_space<vmem>>, %arg4: memref<2x8x32xf32, #tpu.memory_space<vmem>>) attributes {dimension_semantics = [#tpu.dimension_semantics<parallel>], iteration_bounds = array<i64: 1>, scalar_prefetch = 0 : i64, scratch_operands = 0 : i64, tpu.core_type = #tpu.core_type<tc>, window_params = [{transform_indices = @transform_0, window_bounds = array<i64: 2, 8, 32>}, {pipeline_mode = #tpu.pipeline_mode<synchronous>, transform_indices = @transform_1, window_bounds = array<i64: 32, 32>}, {pipeline_mode = #tpu.pipeline_mode<synchronous>, transform_indices = @transform_2, window_bounds = array<i64: 1, 32>}, {transform_indices = @transform_3, window_bounds = array<i64: 2, 8, 32>}]} {
    %c0 = arith.constant 0 : index
    %c0_0 = arith.constant 0 : index
    %0 = vector.load %arg2[%c0, %c0_0] : memref<32x32xf32, #tpu.memory_space<vmem>>, vector<32x32xf32>
    %c0_1 = arith.constant 0 : index
    %c0_2 = arith.constant 0 : index
    %c0_3 = arith.constant 0 : index
    %1 = vector.load %arg1[%c0_1, %c0_2, %c0_3] : memref<2x8x32xf32, #tpu.memory_space<vmem>>, vector<2x8x32xf32>
    %cst = arith.constant dense<0.000000e+00> : vector<2x8x32xf32>
    %2 = tpu.matmul %1, %0, %cst {dimension_numbers = #tpu.dot_dimension_numbers<[2], [0], [0, 1], [1], [0, 0, 0, 1, 1, 1], [], []>} : vector<2x8x32xf32>, vector<32x32xf32>, vector<2x8x32xf32> -> vector<2x8x32xf32>
    %c0_4 = arith.constant 0 : index
    %c0_5 = arith.constant 0 : index
    %3 = vector.load %arg3[%c0_4, %c0_5] : memref<1x32xf32, #tpu.memory_space<vmem>>, vector<1x32xf32>
    %4 = vector.shape_cast %3 : vector<1x32xf32> to vector<1x1x32xf32>
    %5 = vector.broadcast %4 : vector<1x1x32xf32> to vector<2x8x32xf32>
    %6 = arith.addf %2, %5 : vector<2x8x32xf32>
    %c0_6 = arith.constant 0 : index
    %c0_7 = arith.constant 0 : index
    %c0_8 = arith.constant 0 : index
    %7 = vector.load %arg4[%c0_6, %c0_7, %c0_8] : memref<2x8x32xf32, #tpu.memory_space<vmem>>, vector<2x8x32xf32>
    tpu.vector_store %arg4[%c0_6, %c0_7, %c0_8], %6 {strides = array<i32>} : memref<2x8x32xf32, #tpu.memory_space<vmem>>, vector<2x8x32xf32>,
    return
  }
  func.func @transform_0(%arg0: i32) -> (i32, i32, i32) {
    %c0_i32 = arith.constant 0 : i32
    %c0_i32_0 = arith.constant 0 : i32
    %c0_i32_1 = arith.constant 0 : i32
    return %arg0, %c0_i32, %c0_i32_0 : i32, i32, i32
  }
  func.func @transform_1(%arg0: i32) -> (i32, i32) {
    %c0_i32 = arith.constant 0 : i32
    %c0_i32_0 = arith.constant 0 : i32
    %c0_i32_1 = arith.constant 0 : i32
    return %c0_i32, %c0_i32_0 : i32, i32
  }
  func.func @transform_2(%arg0: i32) -> (i32, i32) {
    %c0_i32 = arith.constant 0 : i32
    %c0_i32_0 = arith.constant 0 : i32
    %c0_i32_1 = arith.constant 0 : i32
    return %c0_i32, %c0_i32_0 : i32, i32
  }
  func.func @transform_3(%arg0: i32) -> (i32, i32, i32) {
    %c0_i32 = arith.constant 0 : i32
    %c0_i32_0 = arith.constant 0 : i32
    %c0_i32_1 = arith.constant 0 : i32
    return %arg0, %c0_i32, %c0_i32_0 : i32, i32, i32
  }
}

</mosaic_0001>

<llo_original>
// kernel: tpu_custom_call.1
$region0: #{tpu_custom_call.1}
  #allocation0 [shape = 'u32[]', space=smem, size = 0x4, offset = 0x4, fixed_abs, tag = 'smem constant byte address 0x4 - core index']
  #allocation1 [shape = 'u32[144,128]{1,0:T(1,128)}', space=vmem, size = 0x12000, scoped, tag = 'internal scratch']
  %s0 = inlined_call_operand.hbm [shape: f32[2,8,32], index: 0, kind: input, shape index: {}]
  %s1 = inlined_call_operand.hbm [shape: f32[32,32], index: 1, kind: input, shape index: {}]
  %s2 = inlined_call_operand.vmem [shape: f32[1,32], index: 2, kind: input, shape index: {}]
  %s3 = inlined_call_operand.hbm [shape: f32[2,8,32], index: 3, kind: output, shape index: {}]
  %s4 = sld [smem:[#allocation0]]
  $region30: #{tpu_custom_call.1} parent=0
    _
  %s6 = ssub.s32 1, %s4
  %s7 = scalar_select 0, %s6, %s4
  $region1: #{tpu_custom_call.1} parent=0
    #allocation2 [shape = 'u8[8192]{0}', space=vmem, size = 0x2000, scoped, tag = 'input window, operand 0, single buffered']
    #allocation3 [shape = 's32[1]{0}', space=sflag, size = 0x4, scoped, tag = 'scoped memory for tpu_custom_call.1']
    #allocation4 [shape = 's32[1]{0}', space=sflag, size = 0x4, scoped, tag = 'scoped memory for tpu_custom_call.1']
    #allocation5 [shape = 'u8[16384]{0}', space=vmem, size = 0x4000, scoped, tag = 'input window, operand 1, single buffered']
    #allocation6 [shape = 's32[1]{0}', space=sflag, size = 0x4, scoped, tag = 'scoped memory for tpu_custom_call.1']
    #allocation7 [shape = 'u8[8192]{0}', space=vmem, size = 0x2000, scoped, tag = 'output window, operand 0, single buffered']
    %8 = vsyncpa [#allocation3], 0
    %9 = vsyncpa [#allocation6], 0
    %10 = vsyncpa [#allocation4], 0
    // Predicated region
    $region2: #{tpu_custom_call.1} parent=1 // pred_check
      _
    $region3: #{tpu_custom_call.1} parent=1 // pred_check_branch
      %12 = sbr.rel (0) target = $region5
    $region4: #{tpu_custom_call.1} parent=1 // pred_region
      %s14 = ssub.s32 256, 256
      %15 = vsyncadd [#allocation3], %s14
      %s16 = sshll.u32 [#allocation2], 4
      %s17 = int_to_ptr.vmem [resolvable:$true] %s16
      %22 = dma.hbm_to_vmem [thread:$0]  %s0, 256, %s17, [#allocation3], 128, 128, 8
    $region5: #{tpu_custom_call.1} parent=1 // pred_fallthru
      _
    // Predicated region
    $region6: #{tpu_custom_call.1} parent=1 // pred_check
      _
    $region7: #{tpu_custom_call.1} parent=1 // pred_check_branch
      %24 = sbr.rel (0) target = $region9
    $region8: #{tpu_custom_call.1} parent=1 // pred_region
      %s26 = ssub.s32 512, 512
      %27 = vsyncadd [#allocation6], %s26
      %s28 = sshll.u32 [#allocation5], 4
      %s29 = int_to_ptr.vmem [resolvable:$true] %s28
      %34 = dma.hbm_to_vmem [thread:$0]  %s1, 512, %s29, [#allocation6], 128, 128, 8
    $region9: #{tpu_custom_call.1} parent=1 // pred_fallthru
      _
    // Predicated region
    $region10: #{tpu_custom_call.1} parent=1 // pred_check
      _
    $region11: #{tpu_custom_call.1} parent=1 // pred_check_branch
      %36 = sbr.rel (0) target = $region13
    $region12: #{tpu_custom_call.1} parent=1 // pred_region
      _
    $region13: #{tpu_custom_call.1} parent=1 // pred_fallthru
      _
    // Predicated region
    $region14: #{tpu_custom_call.1} parent=1 // pred_check
      _
    $region15: #{tpu_custom_call.1} parent=1 // pred_check_branch
      %38 = sbr.rel (0) target = $region17
    $region16: #{tpu_custom_call.1} parent=1 // pred_region
      %39 = dma.done [#allocation3], 256
    $region17: #{tpu_custom_call.1} parent=1 // pred_fallthru
      _
    // Predicated region
    $region18: #{tpu_custom_call.1} parent=1 // pred_check
      _
    $region19: #{tpu_custom_call.1} parent=1 // pred_check_branch
      %41 = sbr.rel (0) target = $region21
    $region20: #{tpu_custom_call.1} parent=1 // pred_region
      %42 = dma.done [#allocation6], 512
    $region21: #{tpu_custom_call.1} parent=1 // pred_fallthru
      _
    %v43 = vld [vmem:[#allocation5] sm:$0xff]
    %v44 = vld [vmem:[#allocation5 + $0x8] sm:$0xff]
    %v45 = vld [vmem:[#allocation5 + $0x10] sm:$0xff]
    %v46 = vld [vmem:[#allocation5 + $0x18] sm:$0xff]
    %v47 = vld [vmem:[#allocation2] sm:$0xff]
    %v48 = vld [vmem:[#allocation2 + $0x8] sm:$0xff]
    %v49 = vld [vmem:[%s2] sm:$0x1]
    %v51 = vlaneseq
    %v52 = vshrl.u32 %v51, 7
    %v53 = vsub.s32 0, %v52
    %v54 = vrot.slane %v49, %v53
    %vm56 = vcmask 261120
    %v58 = vsel %vm56, %v47, 0
    %v61 = vsel %vm56, %v48, 0
    %63 = vmatprep.subr.mxu0 0.0
    %64 = vmatpush1.msra.mxu0 0.0
    %65 = vmatprep.subr.mxu0 0.0
    %66 = vmatpush1.msra.mxu0 0.0
    %67 = vmatprep.subr.mxu0 0.0
    %68 = vmatpush1.msra.mxu0 0.0
    %69 = vmatprep.subr.mxu0 0.0
    %70 = vmatpush1.msra.mxu0 0.0
    %71 = vmatprep.subr.mxu0 0.0
    %72 = vmatpush1.msra.mxu0 0.0
    %73 = vmatprep.subr.mxu0 0.0
    %74 = vmatpush1.msra.mxu0 0.0
    %75 = vmatprep.subr.mxu0 0.0
    %76 = vmatpush1.msra.mxu0 0.0
    %77 = vmatprep.subr.mxu0 0.0
    %78 = vmatpush1.msra.mxu0 0.0
    %79 = vmatprep.subr.mxu0 0.0
    %80 = vmatpush1.msra.mxu0 0.0
    %81 = vmatprep.subr.mxu0 0.0
    %82 = vmatpush1.msra.mxu0 0.0
    %83 = vmatprep.subr.mxu0 0.0
    %84 = vmatpush1.msra.mxu0 0.0
    %85 = vmatprep.subr.mxu0 0.0
    %86 = vmatpush1.msra.mxu0 0.0
    %87 = vmatprep.subr.mxu0 0.0
    %88 = vmatpush1.msra.mxu0 %v46
    %89 = vmatprep.subr.mxu0 0.0
    %90 = vmatpush1.msra.mxu0 %v45
    %91 = vmatprep.subr.mxu0 0.0
    %92 = vmatpush1.msra.mxu0 %v44
    %93 = vmatprep.subr.mxu0 0.0
    %94 = vmatpush1.msra.mxu0 %v43
    %95 = vmatprep.subr.mxu0 0.0
    %96 = vmatpush2.msra.mxu0 0.0
    %97 = vmatprep.subr.mxu0 0.0
    %98 = vmatpush2.msra.mxu0 0.0
    %99 = vmatprep.subr.mxu0 0.0
    %100 = vmatpush2.msra.mxu0 0.0
    %101 = vmatprep.subr.mxu0 0.0
    %102 = vmatpush2.msra.mxu0 0.0
    %103 = vmatprep.subr.mxu0 0.0
    %104 = vmatpush2.msra.mxu0 0.0
    %105 = vmatprep.subr.mxu0 0.0
    %106 = vmatpush2.msra.mxu0 0.0
    %107 = vmatprep.subr.mxu0 0.0
    %108 = vmatpush2.msra.mxu0 0.0
    %109 = vmatprep.subr.mxu0 0.0
    %110 = vmatpush2.msra.mxu0 0.0
    %111 = vmatprep.subr.mxu0 0.0
    %112 = vmatpush2.msra.mxu0 0.0
    %113 = vmatprep.subr.mxu0 0.0
    %114 = vmatpush2.msra.mxu0 0.0
    %115 = vmatprep.subr.mxu0 0.0
    %116 = vmatpush2.msra.mxu0 0.0
    %117 = vmatprep.subr.mxu0 0.0
    %118 = vmatpush2.msra.mxu0 0.0
    %119 = vmatprep.subr.mxu0 0.0
    %120 = vmatpush2.msra.mxu0 0.0
    %121 = vmatprep.subr.mxu0 0.0
    %122 = vmatpush2.msra.mxu0 0.0
    %123 = vmatprep.subr.mxu0 0.0
    %124 = vmatpush2.msra.mxu0 0.0
    %125 = vmatprep.subr.mxu0 0.0
    %126 = vmatpush2.msra.mxu0 0.0
    %127 = vmatprep.mubr.f32.mxu0 0.0
    %128 = vmatmul.mubr.f32.gmra.mxu0 %v58
    %v129 = vpop.f32.mrf.mxu0
    %v130 = vadd.f32 %v54, %v129
    %v131 = vpop.f32.mrf.mxu0
    %132 = vmatprep.mubr.f32.mxu0 0.0
    %133 = vmatmul.mubr.f32.gmra.mxu0 %v61
    %v134 = vpop.f32.mrf.mxu0
    %v135 = vadd.f32 %v54, %v134
    %v136 = vpop.f32.mrf.mxu0
    %137 = vdwg.mxu0
    %138 = vst.msk [vmem:[#allocation7] sm:$0xff] %vm56, %v130
    %139 = vst.msk [vmem:[#allocation7 + $0x8] sm:$0xff] %vm56, %v135
    // Predicated region
    $region22: #{tpu_custom_call.1} parent=1 // pred_check
      _
    $region23: #{tpu_custom_call.1} parent=1 // pred_check_branch
      %141 = sbr.rel (0) target = $region25
    $region24: #{tpu_custom_call.1} parent=1 // pred_region
      %s143 = ssub.s32 256, 256
      %144 = vsyncadd [#allocation4], %s143
      %s145 = sshll.u32 [#allocation7], 4
      %s146 = int_to_ptr.vmem [resolvable:$true] %s145
      %151 = dma.vmem_to_hbm [thread:$0]  %s146, 256, %s3, [#allocation4], 128, 128, 8
    $region25: #{tpu_custom_call.1} parent=1 // pred_fallthru
      _
    // Predicated region
    $region26: #{tpu_custom_call.1} parent=1 // pred_check
      _
    $region27: #{tpu_custom_call.1} parent=1 // pred_check_branch
      %153 = sbr.rel (0) target = $region29
    $region28: #{tpu_custom_call.1} parent=1 // pred_region
      %154 = dma.done [#allocation4], 256
    $region29: #{tpu_custom_call.1} parent=1 // pred_fallthru
      _
    %155 = vsyncpa [#allocation3], 1
    %156 = vsyncpa [#allocation6], 1
    %157 = vsyncpa [#allocation4], 1

</llo_original>
